<compile_context>
chip_gen: v6e
topology: v6e:2x2x1
jax: 0.10.0
libtpu: 0.0.40
codegen_flags: <defaults>
</compile_context>

<pallas_src>
import jax
import jax.numpy as jnp
from jax.experimental import pallas as pl
from jax.experimental.pallas import tpu as pltpu


def _conv1x1_vpu_kernel(w_ref, b_ref, x_ref, o_ref):
    # w_ref: (T, C) SMEM   b_ref: (T,) SMEM
    # x_ref: (1, C, tL) VMEM   o_ref: (1, T, tL) VMEM
    T, C = w_ref.shape
    x = x_ref[0].astype(jnp.float32)                 # (C, tL), lane-dense
    x_rows = [x[c:c + 1, :] for c in range(C)]       # extract each sublane once
    rows = []
    for t in range(T):
        acc = x_rows[0] * w_ref[t, 0]                # scalar * vector (VPU)
        for c in range(1, C):
            acc = acc + x_rows[c] * w_ref[t, c]
        rows.append(acc + b_ref[t])
    y = jnp.concatenate(rows, axis=0)                # (T, tL)
    o_ref[0] = y.astype(o_ref.dtype)


def _conv1x1_mxu_kernel(w_ref, b_ref, x_ref, o_ref):
    # w_ref: (T, C) VMEM   b_ref: (T, 1) VMEM
    # x_ref: (1, C, tL) VMEM   o_ref: (1, T, tL) VMEM
    x = x_ref[0].astype(jnp.float32)                 # (C, tL)
    w = w_ref[...].astype(jnp.float32)               # (T, C)
    y = jnp.dot(w, x, preferred_element_type=jnp.float32) + b_ref[...]
    o_ref[0] = y.astype(o_ref.dtype)


def _choose_l_tile(L, target=512):
    """Largest multiple-of-128 tile <= target that evenly divides L, else L."""
    if L <= target or L % 128 != 0:
        return L
    t = target
    while t >= 128:
        if L % t == 0:
            return t
        t -= 128
    return L


def conv_head_forward(x_ncl, weight_tc, bias_t):
    """ConvHead forward (act_func=None, pool_func=None, norm=False).

    Args:
      x_ncl:     (N, C, L) input, PyTorch NCL layout.
      weight_tc: (T, C) conv weight (PyTorch Conv1d weight squeezed over ksize=1).
      bias_t:    (T,) conv bias.
    Returns:
      (N, T, L) output, matching PyTorch (NCL layout, n_tasks channels).
    """
    N, C, L = x_ncl.shape
    T = weight_tc.shape[0]

    tL = _choose_l_tile(L)
    grid = (N, L // tL)

    w = weight_tc.astype(jnp.float32)
    b = bias_t.astype(jnp.float32)

    dtype_bytes = jnp.dtype(x_ncl.dtype).itemsize
    cost = pl.CostEstimate(
        flops=2 * N * T * C * L,
        transcendentals=0,
        bytes_accessed=(N * C * L + N * T * L) * dtype_bytes + (T * C + T) * 4,
    )
    compiler_params = pltpu.CompilerParams(
        dimension_semantics=("parallel", "parallel"))

    x_spec = pl.BlockSpec((1, C, tL), lambda n, l: (n, 0, l))
    o_spec = pl.BlockSpec((1, T, tL), lambda n, l: (n, 0, l))
    out_shape = jax.ShapeDtypeStruct((N, T, L), x_ncl.dtype)

    # Tiny channel counts (default ConvHead config): stay on the VPU.
    if T * C <= 128:
        return pl.pallas_call(
            _conv1x1_vpu_kernel,
            out_shape=out_shape,
            grid=grid,
            in_specs=[
                pl.BlockSpec(memory_space=pltpu.MemorySpace.SMEM),  # weight
                pl.BlockSpec(memory_space=pltpu.MemorySpace.SMEM),  # bias
                x_spec,
            ],
            out_specs=o_spec,
            compiler_params=compiler_params,
            cost_estimate=cost,
        )(w, b, x_ncl)

    # Larger channel counts: use the MXU.
    return pl.pallas_call(
        _conv1x1_mxu_kernel,
        out_shape=out_shape,
        grid=grid,
        in_specs=[
            pl.BlockSpec((T, C), lambda n, l: (0, 0)),   # weight, constant block
            pl.BlockSpec((T, 1), lambda n, l: (0, 0)),   # bias,   constant block
            x_spec,
        ],
        out_specs=o_spec,
        compiler_params=compiler_params,
        cost_estimate=cost,
    )(w, b.reshape(T, 1), x_ncl)


if __name__ == "__main__":
    key = jax.random.PRNGKey(0)
    kx, kw, kb, kx2, kw2, kb2 = jax.random.split(key, 6)

    # 1) Small shapes consistent with the module defaults:
    #    batch=2, in_channels=4, n_tasks=3, length=16 (VPU-unrolled path).
    N, C, L, T = 2, 4, 16, 3
    x = jax.random.normal(kx, (N, C, L), dtype=jnp.float32)          # NCL input
    weight = jax.random.normal(kw, (T, C), dtype=jnp.float32) * 0.1  # Conv1d (T,C,1) squeezed
    bias = jax.random.normal(kb, (T,), dtype=jnp.float32) * 0.1      # Conv1d bias

    out = jax.block_until_ready(conv_head_forward(x, weight, bias))
    ref = jnp.einsum("ncl,tc->ntl", x, weight) + bias[None, :, None]
    assert out.shape == (N, T, L)
    assert jnp.allclose(out, ref, atol=1e-5, rtol=1e-5)

    # 2) Larger-channel config exercising the MXU path and the L tiling.
    N2, C2, L2, T2 = 2, 64, 1024, 8
    x2 = jax.random.normal(kx2, (N2, C2, L2), dtype=jnp.float32)
    w2 = jax.random.normal(kw2, (T2, C2), dtype=jnp.float32) * 0.1
    b2 = jax.random.normal(kb2, (T2,), dtype=jnp.float32) * 0.1

    out2 = jax.block_until_ready(conv_head_forward(x2, w2, b2))
    ref2 = jnp.einsum("ncl,tc->ntl", x2, w2) + b2[None, :, None]
    assert out2.shape == (N2, T2, L2)
    assert jnp.allclose(out2, ref2, atol=1e-4, rtol=1e-4)

    print("KERNEL_OK")
</pallas_src>

<mosaic_0001>
module attributes {stable_mosaic.version = 11 : i64} {
  func.func @_conv1x1_vpu_kernel(%arg0: i32, %arg1: i32, %arg2: memref<3x4xf32, #tpu.memory_space<smem>>, %arg3: memref<3xf32, #tpu.memory_space<smem>>, %arg4: memref<1x4x16xf32, #tpu.memory_space<vmem>>, %arg5: memref<1x3x16xf32, #tpu.memory_space<vmem>>) attributes {dimension_semantics = [#tpu.dimension_semantics<parallel>, #tpu.dimension_semantics<parallel>], iteration_bounds = array<i64: 2, 1>, scalar_prefetch = 0 : i64, scratch_operands = 0 : i64, tpu.core_type = #tpu.core_type<tc>, window_params = [{transform_indices = @transform_0, window_bounds = array<i64: 3, 4>}, {transform_indices = @transform_1, window_bounds = array<i64: 3>}, {transform_indices = @transform_2, window_bounds = array<i64: 1, 4, 16>}, {transform_indices = @transform_3, window_bounds = array<i64: 1, 3, 16>}]} {
    %c0 = arith.constant 0 : index
    %c0_0 = arith.constant 0 : index
    %c0_1 = arith.constant 0 : index
    %0 = vector.load %arg4[%c0, %c0_0, %c0_1] : memref<1x4x16xf32, #tpu.memory_space<vmem>>, vector<1x4x16xf32>
    %1 = vector.shape_cast %0 : vector<1x4x16xf32> to vector<4x16xf32>
    %2 = vector.extract_strided_slice %1 {offsets = [0, 0], sizes = [1, 16], strides = [1, 1]} : vector<4x16xf32> to vector<1x16xf32>
    %3 = vector.extract_strided_slice %1 {offsets = [1, 0], sizes = [1, 16], strides = [1, 1]} : vector<4x16xf32> to vector<1x16xf32>
    %4 = vector.extract_strided_slice %1 {offsets = [2, 0], sizes = [1, 16], strides = [1, 1]} : vector<4x16xf32> to vector<1x16xf32>
    %5 = vector.extract_strided_slice %1 {offsets = [3, 0], sizes = [1, 16], strides = [1, 1]} : vector<4x16xf32> to vector<1x16xf32>
    %c0_2 = arith.constant 0 : index
    %c0_3 = arith.constant 0 : index
    %6 = memref.load %arg2[%c0_2, %c0_3] : memref<3x4xf32, #tpu.memory_space<smem>>
    %7 = vector.broadcast %6 : f32 to vector<1x16xf32>
    %8 = arith.mulf %2, %7 : vector<1x16xf32>
    %c0_4 = arith.constant 0 : index
    %c1 = arith.constant 1 : index
    %9 = memref.load %arg2[%c0_4, %c1] : memref<3x4xf32, #tpu.memory_space<smem>>
    %10 = vector.broadcast %9 : f32 to vector<1x16xf32>
    %11 = arith.mulf %3, %10 : vector<1x16xf32>
    %12 = arith.addf %8, %11 : vector<1x16xf32>
    %c0_5 = arith.constant 0 : index
    %c2 = arith.constant 2 : index
    %13 = memref.load %arg2[%c0_5, %c2] : memref<3x4xf32, #tpu.memory_space<smem>>
    %14 = vector.broadcast %13 : f32 to vector<1x16xf32>
    %15 = arith.mulf %4, %14 : vector<1x16xf32>
    %16 = arith.addf %12, %15 : vector<1x16xf32>
    %c0_6 = arith.constant 0 : index
    %c3 = arith.constant 3 : index
    %17 = memref.load %arg2[%c0_6, %c3] : memref<3x4xf32, #tpu.memory_space<smem>>
    %18 = vector.broadcast %17 : f32 to vector<1x16xf32>
    %19 = arith.mulf %5, %18 : vector<1x16xf32>
    %20 = arith.addf %16, %19 : vector<1x16xf32>
    %c0_7 = arith.constant 0 : index
    %21 = memref.load %arg3[%c0_7] : memref<3xf32, #tpu.memory_space<smem>>
    %22 = vector.broadcast %21 : f32 to vector<1x16xf32>
    %23 = arith.addf %20, %22 : vector<1x16xf32>
    %c1_8 = arith.constant 1 : index
    %c0_9 = arith.constant 0 : index
    %24 = memref.load %arg2[%c1_8, %c0_9] : memref<3x4xf32, #tpu.memory_space<smem>>
    %25 = vector.broadcast %24 : f32 to vector<1x16xf32>
    %26 = arith.mulf %2, %25 : vector<1x16xf32>
    %c1_10 = arith.constant 1 : index
    %c1_11 = arith.constant 1 : index
    %27 = memref.load %arg2[%c1_10, %c1_11] : memref<3x4xf32, #tpu.memory_space<smem>>
    %28 = vector.broadcast %27 : f32 to vector<1x16xf32>
    %29 = arith.mulf %3, %28 : vector<1x16xf32>
    %30 = arith.addf %26, %29 : vector<1x16xf32>
    %c1_12 = arith.constant 1 : index
    %c2_13 = arith.constant 2 : index
    %31 = memref.load %arg2[%c1_12, %c2_13] : memref<3x4xf32, #tpu.memory_space<smem>>
    %32 = vector.broadcast %31 : f32 to vector<1x16xf32>
    %33 = arith.mulf %4, %32 : vector<1x16xf32>
    %34 = arith.addf %30, %33 : vector<1x16xf32>
    %c1_14 = arith.constant 1 : index
    %c3_15 = arith.constant 3 : index
    %35 = memref.load %arg2[%c1_14, %c3_15] : memref<3x4xf32, #tpu.memory_space<smem>>
    %36 = vector.broadcast %35 : f32 to vector<1x16xf32>
    %37 = arith.mulf %5, %36 : vector<1x16xf32>
    %38 = arith.addf %34, %37 : vector<1x16xf32>
    %c1_16 = arith.constant 1 : index
    %39 = memref.load %arg3[%c1_16] : memref<3xf32, #tpu.memory_space<smem>>
    %40 = vector.broadcast %39 : f32 to vector<1x16xf32>
    %41 = arith.addf %38, %40 : vector<1x16xf32>
    %c2_17 = arith.constant 2 : index
    %c0_18 = arith.constant 0 : index
    %42 = memref.load %arg2[%c2_17, %c0_18] : memref<3x4xf32, #tpu.memory_space<smem>>
    %43 = vector.broadcast %42 : f32 to vector<1x16xf32>
    %44 = arith.mulf %2, %43 : vector<1x16xf32>
    %c2_19 = arith.constant 2 : index
    %c1_20 = arith.constant 1 : index
    %45 = memref.load %arg2[%c2_19, %c1_20] : memref<3x4xf32, #tpu.memory_space<smem>>
    %46 = vector.broadcast %45 : f32 to vector<1x16xf32>
    %47 = arith.mulf %3, %46 : vector<1x16xf32>
    %48 = arith.addf %44, %47 : vector<1x16xf32>
    %c2_21 = arith.constant 2 : index
    %c2_22 = arith.constant 2 : index
    %49 = memref.load %arg2[%c2_21, %c2_22] : memref<3x4xf32, #tpu.memory_space<smem>>
    %50 = vector.broadcast %49 : f32 to vector<1x16xf32>
    %51 = arith.mulf %4, %50 : vector<1x16xf32>
    %52 = arith.addf %48, %51 : vector<1x16xf32>
    %c2_23 = arith.constant 2 : index
    %c3_24 = arith.constant 3 : index
    %53 = memref.load %arg2[%c2_23, %c3_24] : memref<3x4xf32, #tpu.memory_space<smem>>
    %54 = vector.broadcast %53 : f32 to vector<1x16xf32>
    %55 = arith.mulf %5, %54 : vector<1x16xf32>
    %56 = arith.addf %52, %55 : vector<1x16xf32>
    %c2_25 = arith.constant 2 : index
    %57 = memref.load %arg3[%c2_25] : memref<3xf32, #tpu.memory_space<smem>>
    %58 = vector.broadcast %57 : f32 to vector<1x16xf32>
    %59 = arith.addf %56, %58 : vector<1x16xf32>
    %60 = tpu.concatenate %23, %41, %59 in 0 : vector<1x16xf32>, vector<1x16xf32>, vector<1x16xf32> -> vector<3x16xf32>
    %c0_26 = arith.constant 0 : index
    %c0_27 = arith.constant 0 : index
    %c0_28 = arith.constant 0 : index
    %61 = vector.load %arg5[%c0_26, %c0_27, %c0_28] : memref<1x3x16xf32, #tpu.memory_space<vmem>>, vector<1x3x16xf32>
    %62 = vector.shape_cast %61 : vector<1x3x16xf32> to vector<3x16xf32>
    %63 = vector.shape_cast %60 : vector<3x16xf32> to vector<1x3x16xf32>
    tpu.vector_store %arg5[%c0_26, %c0_27, %c0_28], %63 {strides = array<i32>} : memref<1x3x16xf32, #tpu.memory_space<vmem>>, vector<1x3x16xf32>,
    return
  }
  func.func @transform_0(%arg0: i32, %arg1: i32) -> (i32, i32) {
    %c0_i32 = arith.constant 0 : i32
    %c0_i32_0 = arith.constant 0 : i32
    %c0_i32_1 = arith.constant 0 : i32
    return %c0_i32, %c0_i32_0 : i32, i32
  }
  func.func @transform_1(%arg0: i32, %arg1: i32) -> i32 {
    %c0_i32 = arith.constant 0 : i32
    %c0_i32_0 = arith.constant 0 : i32
    return %c0_i32 : i32
  }
  func.func @transform_2(%arg0: i32, %arg1: i32) -> (i32, i32, i32) {
    %c0_i32 = arith.constant 0 : i32
    %c0_i32_0 = arith.constant 0 : i32
    return %arg0, %c0_i32, %arg1 : i32, i32, i32
  }
  func.func @transform_3(%arg0: i32, %arg1: i32) -> (i32, i32, i32) {
    %c0_i32 = arith.constant 0 : i32
    %c0_i32_0 = arith.constant 0 : i32
    return %arg0, %c0_i32, %arg1 : i32, i32, i32
  }
}

</mosaic_0001>

<llo_original>
// kernel: tpu_custom_call.1
$region0: #{tpu_custom_call.1}
  #allocation0 [shape = 'u32[]', space=smem, size = 0x4, offset = 0x4, fixed_abs, tag = 'smem constant byte address 0x4 - core index']
  #allocation1 [shape = 'u32[144,128]{1,0:T(1,128)}', space=vmem, size = 0x12000, scoped, tag = 'internal scratch']
  %s0 = inlined_call_operand.hbm [shape: f32[3,4], index: 0, kind: input, shape index: {}]
  %s1 = inlined_call_operand.vmem [shape: f32[3], index: 1, kind: input, shape index: {}]
  %s2 = inlined_call_operand.hbm [shape: f32[2,4,16], index: 2, kind: input, shape index: {}]
  %s3 = inlined_call_operand.vmem [shape: f32[2,3,16], index: 3, kind: output, shape index: {}]
  %s4 = sld [smem:[#allocation0]]
  $region57: #{tpu_custom_call.1} parent=0
    _
  %s6 = ssub.s32 1, %s4
  %s7 = scalar_select 0, %s6, %s4
  $region1: #{tpu_custom_call.1} parent=0
    #allocation2 [shape = 'u8[2048]{0}', space=smem, size = 0x800, scoped, tag = 'input window, operand 0, single buffered']
    #allocation3 [shape = 's32[2]{0}', space=sflag, size = 0x8, scoped, tag = 'scoped memory for tpu_custom_call.1']
    #allocation4 [shape = 's32[2]{0}', space=sflag, size = 0x8, scoped, tag = 'scoped memory for tpu_custom_call.1']
    #allocation5 [shape = 's32[2]{0}', space=sflag, size = 0x8, scoped, tag = 'scoped memory for tpu_custom_call.1']
    #allocation6 [shape = 'u8[512]{0}', space=smem, size = 0x200, scoped, tag = 'input window, operand 1, single buffered']
    #allocation7 [shape = 'u8[4096]{0}', space=vmem, size = 0x1000, scoped, tag = 'input window, operand 2']
    %8 = vsyncpa [#allocation4], 0
    %9 = vsyncpa [#allocation5], 0
    %10 = vsyncpa [#allocation3], 0
    %s11 = scalar_lea.sflag [#allocation3], 1
    %12 = vsyncpa %s11, 0
    loop: start=0, step=1, limit=4
    $region2: #{tpu_custom_call.1} parent=1 // loop_pre_header
      _
    $region3: #{tpu_custom_call.1} parent=1 // loop_header
      %s14 = sphi 0, %s18
      %p15 = scmp.ge.s32.totalorder %s14, 4
      %s21 = sphi 0, %s33
      %s22 = sphi 0, %s29
      %s23 = sphi 0, %s21
      %s24 = sphi 0, %s22
      %s25 = sphi 0, %s23
      %s26 = sphi 0, %s24
      %s34 = sphi 0, %s34
      %s36 = sphi 0, %s34
      %s37 = sphi 0, %s36
      %s51 = sphi 0, %s37
      %s55 = sphi 0, %s55
      %s57 = sphi 0, %s55
      %s58 = sphi 0, %s57
      %s72 = sphi 0, %s58
      %s80 = sphi 0, %s82
      %s83 = sphi 0, %s80
      %s84 = sphi 0, %s83
      %s100 = sphi 0, %s84
      %s108 = sphi 0, %s110
      %s111 = sphi 0, %s108
      %s112 = sphi 0, %s111
      %s128 = sphi 0, %s112
    $region4: #{tpu_custom_call.1} parent=1 // loop_header_branch
      %17 = sbr.rel (%p15) target = $region8
    $region5: #{tpu_custom_call.1} parent=1 // loop_body
      %s19 = ssub.s32 %s14, 1
      %s20 = ssub.s32 %s14, 2
      %s27 = sadd.s32 1, %s22
      %p28 = scmp.ge.s32.totalorder %s27, 1
      %s29 = scalar_select %p28, 0, %s27
      %s30 = sadd.s32 1, %s21
      %s31 = scalar_select %p28, %s30, %s21
      %p32 = scmp.ge.s32.totalorder %s31, 2
      %s33 = scalar_select %p32, 0, %s31
      %s35 = sadd.s32 %s34, 1
      %p38 = scmp.eq.s32.totalorder %s14, 1
      %p39 = scmp.ne.s32.totalorder %s34, %s36
      %p40 = scmp.eq.s32.totalorder %s14, 0
      %p41 = por %p39, %p40
      %p42 = scmp.ne.s32.totalorder %s34, %s36
      %p43 = scmp.eq.s32.totalorder %s19, 1
      %p44 = por %p42, %p43
      %p45 = scmp.ne.s32.totalorder %s36, %s37
      %p46 = scmp.eq.s32.totalorder %s19, 0
      %p47 = por %p45, %p46
      %p48 = scmp.ne.s32.totalorder %s36, %s37
      %p49 = scmp.eq.s32.totalorder %s20, 1
      %p50 = por %p48, %p49
      %p52 = scmp.ne.s32.totalorder %s37, %s51
      %p53 = scmp.eq.s32.totalorder %s20, 0
      %p54 = por %p52, %p53
      %s56 = sadd.s32 %s55, 1
      %p59 = scmp.eq.s32.totalorder %s14, 1
      %p60 = scmp.ne.s32.totalorder %s55, %s57
      %p61 = scmp.eq.s32.totalorder %s14, 0
      %p62 = por %p60, %p61
      %p63 = scmp.ne.s32.totalorder %s55, %s57
      %p64 = scmp.eq.s32.totalorder %s19, 1
      %p65 = por %p63, %p64
      %p66 = scmp.ne.s32.totalorder %s57, %s58
      %p67 = scmp.eq.s32.totalorder %s19, 0
      %p68 = por %p66, %p67
      %p69 = scmp.ne.s32.totalorder %s57, %s58
      %p70 = scmp.eq.s32.totalorder %s20, 1
      %p71 = por %p69, %p70
      %p73 = scmp.ne.s32.totalorder %s58, %s72
      %p74 = scmp.eq.s32.totalorder %s20, 0
      %p75 = por %p73, %p74
      %s76 = ssub.s32 %s21, %s33
      %s77 = ssub.s32 %s22, %s29
      %s78 = sor.u32 %s76, %s77
      %p79 = scmp.eq.s32.totalorder %s78, 0
      %s81 = sadd.s32 %s80, 1
      %s82 = scalar_select %p79, %s80, %s81
      %p85 = pneg %p79
      %p86 = scmp.eq.s32.totalorder %s14, 1
      %p87 = por %p85, %p86
      %p88 = scmp.ne.s32.totalorder %s80, %s83
      %p89 = scmp.eq.s32.totalorder %s14, 0
      %p90 = por %p88, %p89
      %p91 = scmp.ne.s32.totalorder %s80, %s83
      %p92 = scmp.eq.s32.totalorder %s19, 1
      %p93 = por %p91, %p92
      %p94 = scmp.ne.s32.totalorder %s83, %s84
      %p95 = scmp.eq.s32.totalorder %s19, 0
      %p96 = por %p94, %p95
      %p97 = scmp.ne.s32.totalorder %s83, %s84
      %p98 = scmp.eq.s32.totalorder %s20, 1
      %p99 = por %p97, %p98
      %p101 = scmp.ne.s32.totalorder %s84, %s100
      %p102 = scmp.eq.s32.totalorder %s20, 0
      %p103 = por %p101, %p102
      %s104 = ssub.s32 %s21, %s33
      %s105 = ssub.s32 %s22, %s29
      %s106 = sor.u32 %s104, %s105
      %p107 = scmp.eq.s32.totalorder %s106, 0
      %s109 = sadd.s32 %s108, 1
      %s110 = scalar_select %p107, %s108, %s109
      %p113 = pneg %p107
      %p114 = scmp.eq.s32.totalorder %s14, 1
      %p115 = por %p113, %p114
      %p116 = scmp.ne.s32.totalorder %s108, %s111
      %p117 = scmp.eq.s32.totalorder %s14, 0
      %p118 = por %p116, %p117
      %p119 = scmp.ne.s32.totalorder %s108, %s111
      %p120 = scmp.eq.s32.totalorder %s19, 1
      %p121 = por %p119, %p120
      %p122 = scmp.ne.s32.totalorder %s111, %s112
      %p123 = scmp.eq.s32.totalorder %s19, 0
      %p124 = por %p122, %p123
      %p125 = scmp.ne.s32.totalorder %s111, %s112
      %p126 = scmp.eq.s32.totalorder %s20, 1
      %p127 = por %p125, %p126
      %p129 = scmp.ne.s32.totalorder %s112, %s128
      %p130 = scmp.eq.s32.totalorder %s20, 0
      %p131 = por %p129, %p130
      %p132 = scmp.le.s32.totalorder 1, %s14
      %p133 = scmp.lt.s32.totalorder %s14, 3
      %p134 = pnand %p132, %p133
      %p135 = pneg %p134
      // Predicated region
      $region9: #{tpu_custom_call.1} parent=5 // pred_check
        _
      $region10: #{tpu_custom_call.1} parent=5 // pred_check_branch
        %137 = sbr.rel (%p134) target = $region12
      $region11: #{tpu_custom_call.1} parent=5 // pred_region
        %s138 = ssub.s32 %s14, 1
        // Predicated region
        $region13: #{tpu_custom_call.1} parent=11 // pred_check
          %p139 = pneg %p47
        $region14: #{tpu_custom_call.1} parent=11 // pred_check_branch
          %141 = sbr.rel (%p139) target = $region16
        $region15: #{tpu_custom_call.1} parent=11 // pred_region
          %s143 = ssub.s32 64, 64
          %144 = vsyncadd [#allocation4], %s143
          %147 = dma.hbm_to_smem %s0, 64, [#allocation2], [#allocation4]
        $region16: #{tpu_custom_call.1} parent=11 // pred_fallthru
          _
        // Predicated region
        $region17: #{tpu_custom_call.1} parent=11 // pred_check
          %p148 = pneg %p68
        $region18: #{tpu_custom_call.1} parent=11 // pred_check_branch
          %150 = sbr.rel (%p148) target = $region20
        $region19: #{tpu_custom_call.1} parent=11 // pred_region
          %s152 = ssub.s32 16, 16
          %153 = vsyncadd [#allocation5], %s152
          %s155 = sshll.u32 %s1, 4
          %s156 = int_to_ptr.vmem [resolvable:$true] %s155
          %158 = dma.vmem_to_smem %s156, 16, [#allocation6], [#allocation5]
        $region20: #{tpu_custom_call.1} parent=11 // pred_fallthru
          _
      $region12: #{tpu_custom_call.1} parent=5 // pred_fallthru
        _
      %p159 = scmp.lt.s32.totalorder %s14, 2
      // Predicated region
      $region21: #{tpu_custom_call.1} parent=5 // pred_check
        %p160 = pneg %p159
      $region22: #{tpu_custom_call.1} parent=5 // pred_check_branch
        %162 = sbr.rel (%p160) target = $region24
      $region23: #{tpu_custom_call.1} parent=5 // pred_region
        // Predicated region
        $region25: #{tpu_custom_call.1} parent=23 // pred_check
          %p163 = pneg %p90
        $region26: #{tpu_custom_call.1} parent=23 // pred_check_branch
          %165 = sbr.rel (%p163) target = $region28
        $region27: #{tpu_custom_call.1} parent=23 // pred_region
          %s166 = sand.u32 %s80, 1
          %s167 = scalar_lea.sflag [#allocation3], %s166
          %s168 = sand.u32 %s80, 1
          %s169 = smul.addr %s168, 4
          %s170 = scalar_lea.vmem [#allocation7], %s169
          %s172 = ssub.s32 64, 64
          %173 = vsyncadd %s167, %s172
          %s174 = sadd.s32 %s22, %s21
          %s175 = smul.addr %s174, 64
          %s176 = scalar_lea.hbm %s2, %s175
          %s178 = sshll.u32 %s170, 4
          %s179 = int_to_ptr.vmem [resolvable:$true] %s178
          %181 = dma.hbm_to_vmem [thread:$0]  %s176, 64, %s179, %s167
        $region28: #{tpu_custom_call.1} parent=23 // pred_fallthru
          _
      $region24: #{tpu_custom_call.1} parent=5 // pred_fallthru
        _
      %p182 = scmp.le.s32.totalorder 1, %s14
      %p183 = scmp.lt.s32.totalorder %s14, 3
      %p184 = pnand %p182, %p183
      %p185 = pneg %p184
      // Predicated region
      $region29: #{tpu_custom_call.1} parent=5 // pred_check
        _
      $region30: #{tpu_custom_call.1} parent=5 // pred_check_branch
        %187 = sbr.rel (%p184) target = $region32
      $region31: #{tpu_custom_call.1} parent=5 // pred_region
        %s188 = ssub.s32 %s14, 1
        // Predicated region
        $region33: #{tpu_custom_call.1} parent=31 // pred_check
          %p189 = pneg %p47
        $region34: #{tpu_custom_call.1} parent=31 // pred_check_branch
          %191 = sbr.rel (%p189) target = $region36
        $region35: #{tpu_custom_call.1} parent=31 // pred_region
          %192 = dma.done [#allocation4], 64
        $region36: #{tpu_custom_call.1} parent=31 // pred_fallthru
          _
        // Predicated region
        $region37: #{tpu_custom_call.1} parent=31 // pred_check
          %p193 = pneg %p68
        $region38: #{tpu_custom_call.1} parent=31 // pred_check_branch
          %195 = sbr.rel (%p193) target = $region40
        $region39: #{tpu_custom_call.1} parent=31 // pred_region
          %196 = dma.done [#allocation5], 16
        $region40: #{tpu_custom_call.1} parent=31 // pred_fallthru
          _
        %s197 = sand.u32 %s83, 1
        %s198 = scalar_lea.sflag [#allocation3], %s197
        %s199 = sand.u32 %s83, 1
        %s200 = smul.addr %s199, 4
        %s201 = scalar_lea.vmem [#allocation7], %s200
        // Predicated region
        $region41: #{tpu_custom_call.1} parent=31 // pred_check
          %p202 = pneg %p96
        $region42: #{tpu_custom_call.1} parent=31 // pred_check_branch
          %204 = sbr.rel (%p202) target = $region44
        $region43: #{tpu_custom_call.1} parent=31 // pred_region
          %205 = dma.done %s198, 64
        $region44: #{tpu_custom_call.1} parent=31 // pred_fallthru
          _
        %206 = sfence
        %p207 = pneg %p47
        %p208 = pneg %p44
        %p209 = pneg %p68
        %p210 = pneg %p65
        %s211 = sand.u32 %s83, 1
        %s212 = scalar_lea.sflag [#allocation3], %s211
        %s213 = sand.u32 %s83, 1
        %s214 = smul.addr %s213, 4
        %s215 = scalar_lea.vmem [#allocation7], %s214
        %p216 = pneg %p96
        %p217 = pneg %p93
        %p218 = pneg %p124
        %p219 = pneg %p121
        %p220 = scmp.lt.s32.totalorder %s23, 1
        %s221 = scalar_select %p220, %s23, 1
        %p222 = scmp.lt.s32.totalorder %s24, 0
        %s223 = scalar_select %p222, %s24, 0
        %s224 = sadd.s32 %s223, %s221
        %s225 = smul.addr %s224, 4
        %s226 = scalar_lea.vmem %s3, %s225
        %p227 = scmp.lt.s32.totalorder %s23, 1
        %s228 = scalar_select %p227, %s23, 1
        %p229 = scmp.lt.s32.totalorder %s24, 0
        %s230 = scalar_select %p229, %s24, 0
        %s231 = sadd.s32 %s230, %s228
        %s232 = smul.addr %s231, 4
        %s233 = scalar_lea.vmem %s3, %s232
        %v234 = vld [vmem:[%s201] sm:$0xf]
        %s235 = sld [smem:[#allocation2]]
        %v236 = vstv %s235
        %v237 = vmul.f32 %v234, %v236
        %s238 = sld [smem:[#allocation2 + $0x1]]
        %v239 = vstv %s238
        %v240 = vmul.f32 %v234, %v239
        %v242 = vrot.slane %v240, 1
        %v244 = vadd.f32 %v237, %v242
        %s245 = sld [smem:[#allocation2 + $0x2]]
        %v246 = vstv %s245
        %v247 = vmul.f32 %v234, %v246
        %v249 = vrot.slane %v247, 2
        %v251 = vadd.f32 %v244, %v249
        %s252 = sld [smem:[#allocation2 + $0x3]]
        %v253 = vstv %s252
        %v254 = vmul.f32 %v234, %v253
        %v256 = vrot.slane %v254, 3
        %v258 = vadd.f32 %v251, %v256
        %s259 = sld [smem:[#allocation6]]
        %v260 = vstv %s259
        %v261 = vadd.f32 %v258, %v260
        %s262 = sld [smem:[#allocation2 + $0x80]]
        %v263 = vstv %s262
        %v264 = vmul.f32 %v234, %v263
        %s265 = sld [smem:[#allocation2 + $0x81]]
        %v266 = vstv %s265
        %v267 = vmul.f32 %v234, %v266
        %v269 = vrot.slane %v267, 1
        %v271 = vadd.f32 %v264, %v269
        %s272 = sld [smem:[#allocation2 + $0x82]]
        %v273 = vstv %s272
        %v274 = vmul.f32 %v234, %v273
        %v276 = vrot.slane %v274, 2
        %v278 = vadd.f32 %v271, %v276
        %s279 = sld [smem:[#allocation2 + $0x83]]
        %v280 = vstv %s279
        %v281 = vmul.f32 %v234, %v280
        %v283 = vrot.slane %v281, 3
        %v285 = vadd.f32 %v278, %v283
        %s286 = sld [smem:[#allocation6 + $0x1]]
        %v287 = vstv %s286
        %v288 = vadd.f32 %v285, %v287
        %s289 = sld [smem:[#allocation2 + $0x100]]
        %v290 = vstv %s289
        %v291 = vmul.f32 %v234, %v290
        %s292 = sld [smem:[#allocation2 + $0x101]]
        %v293 = vstv %s292
        %v294 = vmul.f32 %v234, %v293
        %v296 = vrot.slane %v294, 1
        %v298 = vadd.f32 %v291, %v296
        %s299 = sld [smem:[#allocation2 + $0x102]]
        %v300 = vstv %s299
        %v301 = vmul.f32 %v234, %v300
        %v303 = vrot.slane %v301, 2
        %v305 = vadd.f32 %v298, %v303
        %s306 = sld [smem:[#allocation2 + $0x103]]
        %v307 = vstv %s306
        %v308 = vmul.f32 %v234, %v307
        %v310 = vrot.slane %v308, 3
        %v312 = vadd.f32 %v305, %v310
        %s313 = sld [smem:[#allocation6 + $0x2]]
        %v314 = vstv %s313
        %v315 = vadd.f32 %v312, %v314
        %v317 = vrot.slane %v288, 7
        %v320 = vrot.slane %v315, 6
        %vm322 = vcmask 1040384
        %v323 = vsel %vm322, %v261, %v317
        %vm324 = vcmask 1041408
        %v325 = vsel %vm324, %v323, %v320
        %vm326 = vcmask 124928
        %327 = vst.msk [vmem:[%s233] sm:$0x7] %vm326, %v325
        %p328 = scmp.lt.s32.totalorder %s23, 1
        %s329 = scalar_select %p328, %s23, 1
        %p330 = scmp.lt.s32.totalorder %s24, 0
        %s331 = scalar_select %p330, %s24, 0
        %s332 = sadd.s32 %s331, %s329
        %s333 = smul.addr %s332, 4
        %s334 = scalar_lea.vmem %s3, %s333
        // Predicated region
        $region45: #{tpu_custom_call.1} parent=31 // pred_check
          %p335 = pneg %p121
        $region46: #{tpu_custom_call.1} parent=31 // pred_check_branch
          %337 = sbr.rel (%p335) target = $region48
        $region47: #{tpu_custom_call.1} parent=31 // pred_region
          _
        $region48: #{tpu_custom_call.1} parent=31 // pred_fallthru
          _
      $region32: #{tpu_custom_call.1} parent=5 // pred_fallthru
        _
      %p338 = scmp.le.s32.totalorder 2, %s14
      // Predicated region
      $region49: #{tpu_custom_call.1} parent=5 // pred_check
        %p339 = pneg %p338
      $region50: #{tpu_custom_call.1} parent=5 // pred_check_branch
        %341 = sbr.rel (%p339) target = $region52
      $region51: #{tpu_custom_call.1} parent=5 // pred_region
        %s342 = ssub.s32 %s14, 2
        // Predicated region
        $region53: #{tpu_custom_call.1} parent=51 // pred_check
          %p343 = pneg %p127
        $region54: #{tpu_custom_call.1} parent=51 // pred_check_branch
          %345 = sbr.rel (%p343) target = $region56
        $region55: #{tpu_custom_call.1} parent=51 // pred_region
          %p346 = scmp.lt.s32.totalorder %s25, 1
          %s347 = scalar_select %p346, %s25, 1
          %p348 = scmp.lt.s32.totalorder %s26, 0
          %s349 = scalar_select %p348, %s26, 0
          %s350 = sadd.s32 %s349, %s347
          %s351 = smul.addr %s350, 4
          %s352 = scalar_lea.vmem %s3, %s351
        $region56: #{tpu_custom_call.1} parent=51 // pred_fallthru
          _
      $region52: #{tpu_custom_call.1} parent=5 // pred_fallthru
        _
    $region6: #{tpu_custom_call.1} parent=1 // loop_footer
      %s18 = sadd.s32 1, %s14
    $region7: #{tpu_custom_call.1} parent=1 // loop_footer_branch
      %13 = sbr.rel target = $region3
    $region8: #{tpu_custom_call.1} parent=1 // loop_exit
      _
    %353 = vsyncpa [#allocation3], 1
    %s354 = scalar_lea.sflag [#allocation3], 1
    %355 = vsyncpa %s354, 1
    %356 = vsyncpa [#allocation4], 1
    %s357 = scalar_lea.sflag [#allocation4], 1
    %358 = vsyncpa %s357, 1
    %359 = vsyncpa [#allocation5], 1
    %s360 = scalar_lea.sflag [#allocation5], 1
    %361 = vsyncpa %s360, 1

</llo_original>
